<compile_context>
chip_gen: v6e
topology: v6e:2x2x1
jax: 0.10.0
libtpu: 0.0.40
codegen_flags: <defaults>
</compile_context>

<pallas_src>
import jax
import jax.numpy as jnp
from jax.experimental import pallas as pl
from jax.experimental.pallas import tpu as pltpu

R_MAX = 20.0
HBAR = 1.0
MASS = 1.0
EPS = 1e-6


# --------------------------------------------------------------------------
# kernel
# --------------------------------------------------------------------------
def _make_kernel():
    def kernel(psi_ref, psi_r_ref, psi_rr_ref, r_ref, psi_true_ref,
               out_ref, schrod_acc, bcnt_acc, bsum_acc, norm_acc, sup_acc):
        i = pl.program_id(1)              # reduction step within this slice
        nsteps = pl.num_programs(1)

        @pl.when(i == 0)
        def _init():
            schrod_acc[...] = jnp.zeros_like(schrod_acc)
            bcnt_acc[...] = jnp.zeros_like(bcnt_acc)
            bsum_acc[...] = jnp.zeros_like(bsum_acc)
            norm_acc[...] = jnp.zeros_like(norm_acc)
            sup_acc[...] = jnp.zeros_like(sup_acc)

        psi = jnp.clip(psi_ref[...], -10.0, 10.0)
        r = r_ref[...]
        tb, nn = psi_ref.shape

        # ---- supervised + boundary partials first (psi_true / mask die early)
        dsup = psi - psi_true_ref[...]
        sup_acc[...] += jnp.sum(dsup * dsup, axis=1, keepdims=True)

        psi2 = psi * psi
        bmask = (r >= R_MAX).astype(jnp.float32)
        bcnt_acc[...] += jnp.sum(bmask, axis=1, keepdims=True)
        bsum_acc[...] += jnp.sum(bmask * psi2, axis=1, keepdims=True)

        # ---- Hamiltonian (V = -1/r_safe)
        r_safe = r + EPS
        # exact divide kept: approx EUP reciprocal's error near r~0 (1/r~1e6)
        # can exceed the 1e-3 accuracy target on the residual term
        inv_r = 1.0 / r_safe
        laplacian = psi_rr_ref[...] + inv_r * psi_r_ref[...]
        H_psi = (-(HBAR * HBAR) / (2.0 * MASS)) * laplacian - inv_r * psi

        # ---- trapezoid weights from r_safe (general non-uniform grids):
        # w[j] = 0.5*(x[j+1]-x[j-1]) interior, half spacing at the two ends.
        # Two XLU lane rotations + lane masks.
        # TODO(synk): for strictly uniform grids this could collapse to a
        # scalar dr plus an end-lane half-weight mask (saves 2 rolls / step).
        lane = jax.lax.broadcasted_iota(jnp.int32, (tb, nn), 1)
        x_prev = jnp.where(lane == 0, r_safe,
                           pltpu.roll(r_safe, shift=1, axis=1))
        x_next = jnp.where(lane == nn - 1, r_safe,
                           pltpu.roll(r_safe, shift=nn - 1, axis=1))
        wr = (0.5 * (x_next - x_prev)) * r_safe     # w * r   (normalization)
        wr2 = wr * r_safe                           # w * r^2 (Rayleigh quotient)

        # ---- Rayleigh quotient + Schrodinger residual (per row)
        # TODO(synk): on v6e/v7x these lane reductions could be moved to the
        # idle MXU (dot with a ones matrix) once the kernel is compute-bound;
        # kept on the VPU/XLU here to avoid f32-via-bf16 matmul precision loss.
        num = jnp.sum(H_psi * psi * wr2, axis=1, keepdims=True)
        den = jnp.sum(psi2 * wr2, axis=1, keepdims=True) + EPS
        E = num / den                               # (tb, 1)
        resid = H_psi - E * psi
        schrod_acc[...] += jnp.sum(resid * resid, axis=1, keepdims=True)

        # ---- normalization partial
        norm_i = jnp.sum(psi2 * wr, axis=1, keepdims=True)
        dn = norm_i - 1.0
        norm_acc[...] += dn * dn

        # ---- write this slice's raw partial sums as one lane-dense (8,128)
        # tile: sublane k holds partial k broadcast across all 128 lanes.
        @pl.when(i == nsteps - 1)
        def _finalize():
            sub = jax.lax.broadcasted_iota(jnp.int32, (8, 128), 0)
            vec = jnp.zeros((8, 128), jnp.float32)
            partials = (
                jnp.sum(schrod_acc[...], axis=0, keepdims=True),   # (1,1)
                jnp.sum(bcnt_acc[...], axis=0, keepdims=True),
                jnp.sum(bsum_acc[...], axis=0, keepdims=True),
                jnp.sum(norm_acc[...], axis=0, keepdims=True),
                jnp.sum(sup_acc[...], axis=0, keepdims=True),
            )
            for k, p in enumerate(partials):
                vec = jnp.where(sub == k, jnp.broadcast_to(p, (8, 128)), vec)
            out_ref[...] = vec

    return kernel


# --------------------------------------------------------------------------
# planning helpers
# --------------------------------------------------------------------------
def _vmem_plan():
    """Generation-aware working-set budget and scoped-VMEM limit (bytes)."""
    try:
        phys = int(pltpu.get_tpu_info().vmem_capacity_bytes)
    except Exception:
        phys = 0
    if phys >= (96 << 20):          # v5e / v6e class: 128 MiB physical VMEM
        return 26 << 20, 32 << 20
    if phys > 0:                    # v7x class: 64 MiB physical per TensorCore
        return 20 << 20, 28 << 20
    return 12 << 20, None           # unknown backend: conservative defaults


def _plan_grid(B, N, budget):
    """Pick (num_par, tile_b).

    num_par is a leading 'parallel' grid axis: on v7x the two TensorCores each
    run half of the batch-tile reduction with their own accumulators; on 1-TC
    chips the two slices simply run back-to-back (same result, negligible
    overhead).  tile_b is the largest batch tile whose double-buffered working
    set (5 f32 streams) fits the VMEM budget.
    """
    total_bytes = 5 * B * N * 4
    if total_bytes <= (2 << 20) or B < 16 or B % 8 != 0:
        return 1, B                                   # single grid step
    cap_rows = max(8, budget // (40 * N))             # 5 streams x 2 bufs x 4B
    divisors = [tb for tb in range(8, B + 1, 8)
                if B % tb == 0 and tb <= cap_rows]
    if not divisors:
        return 1, B
    tile_b = max(divisors)
    if B // tile_b < 2:                               # keep >=2 steps when big
        smaller = [tb for tb in divisors if tb <= B // 2]
        if smaller:
            tile_b = max(smaller)
    steps = B // tile_b
    num_par = 2 if (steps >= 2 and steps % 2 == 0) else 1
    return num_par, tile_b


# --------------------------------------------------------------------------
# wrapper
# --------------------------------------------------------------------------
def quantum_loss_pallas(psi_pred, psi_r, psi_rr, r, psi_true, log_sigmas):
    B, N = psi_pred.shape
    budget, vmem_limit = _vmem_plan()
    num_par, tile_b = _plan_grid(B, N, budget)
    steps = B // tile_b
    spp = steps // num_par              # reduction steps per parallel slice

    field_spec = pl.BlockSpec((tile_b, N), lambda c, i: (c * spp + i, 0))
    cp_kwargs = dict(dimension_semantics=("parallel", "arbitrary"))
    if vmem_limit is not None:
        cp_kwargs["vmem_limit_bytes"] = int(vmem_limit)

    partials = pl.pallas_call(
        _make_kernel(),
        out_shape=jax.ShapeDtypeStruct((num_par * 8, 128), jnp.float32),
        grid_spec=pltpu.PrefetchScalarGridSpec(
            num_scalar_prefetch=0,
            grid=(num_par, spp),
            in_specs=[field_spec,   # psi_pred
                      field_spec,   # psi_r
                      field_spec,   # psi_rr
                      field_spec,   # r
                      field_spec],  # psi_true
            out_specs=pl.BlockSpec((8, 128), lambda c, i: (c, 0)),
            scratch_shapes=[pltpu.VMEM((tile_b, 1), jnp.float32)
                            for _ in range(5)],
        ),
        compiler_params=pltpu.CompilerParams(**cp_kwargs),
    )(psi_pred, psi_r, psi_rr, r, psi_true)

    # combine per-slice raw sums + uncertainty weighting (a few scalar ops)
    sums = jnp.sum(partials[:, 0].reshape(num_par, 8), axis=0)
    schrod_sum, bcnt, bsum = sums[0], sums[1], sums[2]
    norm_sum, sup_sum = sums[3], sums[4]

    inv_bn = 1.0 / float(B * N)
    schrod = schrod_sum * inv_bn
    boundary = jnp.where(bcnt > 0.0, bsum / jnp.maximum(bcnt, 1.0), 0.0)
    norm_loss = norm_sum * (1.0 / float(B)) + EPS
    sup = sup_sum * inv_bn

    ls = log_sigmas
    # log(sigma) == log_sigma ; 1/(2 sigma^2) == 0.5 * exp(-2 log_sigma)
    total = (schrod * (0.5 * jnp.exp(-2.0 * ls[0])) + ls[0]
             + boundary * (0.5 * jnp.exp(-2.0 * ls[1])) + ls[1]
             + norm_loss * (0.5 * jnp.exp(-2.0 * ls[2])) + ls[2]
             + sup * (0.5 * jnp.exp(-2.0 * ls[3])) + ls[3])
    return total


# ---------------- glue: synthetic differentiable psi(r) + derivatives --------
def psi_model(r):
    # deterministic surrogate "network" output, clamped like the torch forward
    return jnp.clip(jnp.exp(-0.5 * r) * (1.0 + 0.1 * r), -10.0, 10.0)


def psi_and_derivs(r):
    ones = jnp.ones_like(r)
    psi, psi_r = jax.jvp(psi_model, (r,), (ones,))

    def first_deriv(rr):
        return jax.jvp(psi_model, (rr,), (jnp.ones_like(rr),))[1]

    _, psi_rr = jax.jvp(first_deriv, (r,), (ones,))
    return psi, psi_r, psi_rr


# ---------------- pure-JAX reference (for verification only) -----------------
def reference_loss(psi, psi_r, psi_rr, r, psi_true, log_sigmas):
    psi = jnp.clip(psi, -10.0, 10.0)
    r_safe = r + EPS
    lap = psi_rr + psi_r / r_safe
    V = -1.0 / r_safe
    H_psi = -(HBAR ** 2) / (2.0 * MASS) * lap + V * psi

    def trapz(y, x):
        return jnp.sum(0.5 * (y[:, 1:] + y[:, :-1]) * (x[:, 1:] - x[:, :-1]),
                       axis=1)

    num = trapz(H_psi * psi * r_safe ** 2, r_safe)
    den = trapz(psi ** 2 * r_safe ** 2, r_safe) + EPS
    E = num / den
    schrod = jnp.mean((H_psi - E[:, None] * psi) ** 2)
    mask = r >= R_MAX
    nb = jnp.sum(mask.astype(jnp.float32))
    boundary = jnp.where(
        nb > 0,
        jnp.sum(jnp.where(mask, psi ** 2, 0.0)) / jnp.maximum(nb, 1.0),
        0.0)
    norm_int = trapz(psi ** 2 * r_safe, r_safe)
    norm_loss = jnp.mean((norm_int - 1.0) ** 2 + EPS)
    sup = jnp.mean((psi - psi_true) ** 2)
    s = jnp.exp(log_sigmas)
    losses = jnp.stack([schrod, boundary, norm_loss, sup])
    return jnp.sum(losses / (2.0 * s ** 2) + jnp.log(s))


if __name__ == "__main__":
    B, N = 16, 128          # batch padded to a multiple of 8 (full sublanes)
    key = jax.random.PRNGKey(0)
    k_r, k_t = jax.random.split(key)

    # radial grid extends past r_max so the boundary term is exercised
    base = jnp.linspace(0.0, 25.0, N, dtype=jnp.float32)
    jitter = 0.05 * jax.random.uniform(k_r, (B, 1), dtype=jnp.float32)
    r = base[None, :] + jitter                                   # (B, N)
    theta = jax.random.uniform(k_t, (B, N), dtype=jnp.float32)   # unused by forward
    psi_true = (2.0 * jnp.exp(-r)).astype(jnp.float32)           # (B, N)

    # deterministic module parameters: log_sigma_{1..4} initialized to 0.0
    log_sigmas = jnp.zeros((4,), jnp.float32)

    psi_pred, psi_r, psi_rr = psi_and_derivs(r)

    loss = quantum_loss_pallas(psi_pred, psi_r, psi_rr, r, psi_true, log_sigmas)
    loss = jax.block_until_ready(loss)

    ref = reference_loss(psi_pred, psi_r, psi_rr, r, psi_true, log_sigmas)
    assert jnp.isfinite(loss), "NaN or Inf detected in total_loss"
    assert jnp.allclose(loss, ref, rtol=1e-3, atol=1e-4), (loss, ref)

    print("KERNEL_OK")
</pallas_src>

<mosaic_0001>
module attributes {stable_mosaic.version = 11 : i64} {
  func.func @kernel(%arg0: i32, %arg1: i32, %arg2: memref<16x128xf32, #tpu.memory_space<vmem>>, %arg3: memref<16x128xf32, #tpu.memory_space<vmem>>, %arg4: memref<16x128xf32, #tpu.memory_space<vmem>>, %arg5: memref<16x128xf32, #tpu.memory_space<vmem>>, %arg6: memref<16x128xf32, #tpu.memory_space<vmem>>, %arg7: memref<8x128xf32, #tpu.memory_space<vmem>>, %arg8: memref<16x1xf32, #tpu.memory_space<vmem>>, %arg9: memref<16x1xf32, #tpu.memory_space<vmem>>, %arg10: memref<16x1xf32, #tpu.memory_space<vmem>>, %arg11: memref<16x1xf32, #tpu.memory_space<vmem>>, %arg12: memref<16x1xf32, #tpu.memory_space<vmem>>) attributes {dimension_semantics = [#tpu.dimension_semantics<parallel>, #tpu.dimension_semantics<arbitrary>], iteration_bounds = array<i64: 1, 1>, scalar_prefetch = 0 : i64, scratch_operands = 5 : i64, tpu.core_type = #tpu.core_type<tc>, window_params = [{transform_indices = @transform_0, window_bounds = array<i64: 16, 128>}, {transform_indices = @transform_1, window_bounds = array<i64: 16, 128>}, {transform_indices = @transform_2, window_bounds = array<i64: 16, 128>}, {transform_indices = @transform_3, window_bounds = array<i64: 16, 128>}, {transform_indices = @transform_4, window_bounds = array<i64: 16, 128>}, {transform_indices = @transform_5, window_bounds = array<i64: 8, 128>}]} {
    %c0_i32 = arith.constant 0 : i32
    %0 = arith.cmpi eq, %arg1, %c0_i32 : i32
    %1 = arith.extui %0 : i1 to i32
    %c0_i32_0 = arith.constant 0 : i32
    %2 = arith.cmpi ne, %1, %c0_i32_0 : i32
    scf.if %2 {
      %cst_49 = arith.constant 0.000000e+00 : f32
      %90 = vector.broadcast %cst_49 : f32 to vector<16x1xf32>
      %c0_50 = arith.constant 0 : index
      %c0_51 = arith.constant 0 : index
      %91 = vector.load %arg8[%c0_50, %c0_51] : memref<16x1xf32, #tpu.memory_space<vmem>>, vector<16x1xf32>
      tpu.vector_store %arg8[%c0_50, %c0_51], %90 {strides = array<i32>} : memref<16x1xf32, #tpu.memory_space<vmem>>, vector<16x1xf32>,
      %cst_52 = arith.constant 0.000000e+00 : f32
      %92 = vector.broadcast %cst_52 : f32 to vector<16x1xf32>
      %c0_53 = arith.constant 0 : index
      %c0_54 = arith.constant 0 : index
      %93 = vector.load %arg9[%c0_53, %c0_54] : memref<16x1xf32, #tpu.memory_space<vmem>>, vector<16x1xf32>
      tpu.vector_store %arg9[%c0_53, %c0_54], %92 {strides = array<i32>} : memref<16x1xf32, #tpu.memory_space<vmem>>, vector<16x1xf32>,
      %cst_55 = arith.constant 0.000000e+00 : f32
      %94 = vector.broadcast %cst_55 : f32 to vector<16x1xf32>
      %c0_56 = arith.constant 0 : index
      %c0_57 = arith.constant 0 : index
      %95 = vector.load %arg10[%c0_56, %c0_57] : memref<16x1xf32, #tpu.memory_space<vmem>>, vector<16x1xf32>
      tpu.vector_store %arg10[%c0_56, %c0_57], %94 {strides = array<i32>} : memref<16x1xf32, #tpu.memory_space<vmem>>, vector<16x1xf32>,
      %cst_58 = arith.constant 0.000000e+00 : f32
      %96 = vector.broadcast %cst_58 : f32 to vector<16x1xf32>
      %c0_59 = arith.constant 0 : index
      %c0_60 = arith.constant 0 : index
      %97 = vector.load %arg11[%c0_59, %c0_60] : memref<16x1xf32, #tpu.memory_space<vmem>>, vector<16x1xf32>
      tpu.vector_store %arg11[%c0_59, %c0_60], %96 {strides = array<i32>} : memref<16x1xf32, #tpu.memory_space<vmem>>, vector<16x1xf32>,
      %cst_61 = arith.constant 0.000000e+00 : f32
      %98 = vector.broadcast %cst_61 : f32 to vector<16x1xf32>
      %c0_62 = arith.constant 0 : index
      %c0_63 = arith.constant 0 : index
      %99 = vector.load %arg12[%c0_62, %c0_63] : memref<16x1xf32, #tpu.memory_space<vmem>>, vector<16x1xf32>
      tpu.vector_store %arg12[%c0_62, %c0_63], %98 {strides = array<i32>} : memref<16x1xf32, #tpu.memory_space<vmem>>, vector<16x1xf32>,
    } else {
    }
    %c0 = arith.constant 0 : index
    %c0_1 = arith.constant 0 : index
    %3 = vector.load %arg2[%c0, %c0_1] : memref<16x128xf32, #tpu.memory_space<vmem>>, vector<16x128xf32>
    %cst = arith.constant -1.000000e+01 : f32
    %cst_2 = arith.constant 1.000000e+01 : f32
    %4 = vector.broadcast %cst : f32 to vector<16x128xf32>
    %5 = arith.maximumf %4, %3 : vector<16x128xf32>
    %6 = vector.broadcast %cst_2 : f32 to vector<16x128xf32>
    %7 = arith.minimumf %6, %5 : vector<16x128xf32>
    %c0_3 = arith.constant 0 : index
    %c0_4 = arith.constant 0 : index
    %8 = vector.load %arg5[%c0_3, %c0_4] : memref<16x128xf32, #tpu.memory_space<vmem>>, vector<16x128xf32>
    %c0_5 = arith.constant 0 : index
    %c0_6 = arith.constant 0 : index
    %9 = vector.load %arg6[%c0_5, %c0_6] : memref<16x128xf32, #tpu.memory_space<vmem>>, vector<16x128xf32>
    %10 = arith.subf %7, %9 : vector<16x128xf32>
    %c0_7 = arith.constant 0 : index
    %c0_8 = arith.constant 0 : index
    %11 = vector.load %arg12[%c0_7, %c0_8] : memref<16x1xf32, #tpu.memory_space<vmem>>, vector<16x1xf32>
    %12 = arith.mulf %10, %10 : vector<16x128xf32>
    %cst_9 = arith.constant dense<0.000000e+00> : vector<16xf32>
    %13 = vector.multi_reduction <add>, %12, %cst_9 [1] : vector<16x128xf32> to vector<16xf32>
    %14 = vector.shape_cast %13 : vector<16xf32> to vector<16x1xf32>
    %15 = arith.addf %11, %14 : vector<16x1xf32>
    %c0_10 = arith.constant 0 : index
    %c0_11 = arith.constant 0 : index
    %16 = vector.load %arg12[%c0_10, %c0_11] : memref<16x1xf32, #tpu.memory_space<vmem>>, vector<16x1xf32>
    tpu.vector_store %arg12[%c0_10, %c0_11], %15 {strides = array<i32>} : memref<16x1xf32, #tpu.memory_space<vmem>>, vector<16x1xf32>,
    %17 = arith.mulf %7, %7 : vector<16x128xf32>
    %cst_12 = arith.constant 2.000000e+01 : f32
    %18 = vector.broadcast %cst_12 : f32 to vector<16x128xf32>
    %19 = arith.cmpf oge, %8, %18 : vector<16x128xf32>
    %20 = arith.extui %19 : vector<16x128xi1> to vector<16x128xi32>
    %21 = arith.sitofp %20 : vector<16x128xi32> to vector<16x128xf32>
    %c0_13 = arith.constant 0 : index
    %c0_14 = arith.constant 0 : index
    %22 = vector.load %arg9[%c0_13, %c0_14] : memref<16x1xf32, #tpu.memory_space<vmem>>, vector<16x1xf32>
    %cst_15 = arith.constant dense<0.000000e+00> : vector<16xf32>
    %23 = vector.multi_reduction <add>, %21, %cst_15 [1] : vector<16x128xf32> to vector<16xf32>
    %24 = vector.shape_cast %23 : vector<16xf32> to vector<16x1xf32>
    %25 = arith.addf %22, %24 : vector<16x1xf32>
    %c0_16 = arith.constant 0 : index
    %c0_17 = arith.constant 0 : index
    %26 = vector.load %arg9[%c0_16, %c0_17] : memref<16x1xf32, #tpu.memory_space<vmem>>, vector<16x1xf32>
    tpu.vector_store %arg9[%c0_16, %c0_17], %25 {strides = array<i32>} : memref<16x1xf32, #tpu.memory_space<vmem>>, vector<16x1xf32>,
    %c0_18 = arith.constant 0 : index
    %c0_19 = arith.constant 0 : index
    %27 = vector.load %arg10[%c0_18, %c0_19] : memref<16x1xf32, #tpu.memory_space<vmem>>, vector<16x1xf32>
    %28 = arith.mulf %21, %17 : vector<16x128xf32>
    %cst_20 = arith.constant dense<0.000000e+00> : vector<16xf32>
    %29 = vector.multi_reduction <add>, %28, %cst_20 [1] : vector<16x128xf32> to vector<16xf32>
    %30 = vector.shape_cast %29 : vector<16xf32> to vector<16x1xf32>
    %31 = arith.addf %27, %30 : vector<16x1xf32>
    %c0_21 = arith.constant 0 : index
    %c0_22 = arith.constant 0 : index
    %32 = vector.load %arg10[%c0_21, %c0_22] : memref<16x1xf32, #tpu.memory_space<vmem>>, vector<16x1xf32>
    tpu.vector_store %arg10[%c0_21, %c0_22], %31 {strides = array<i32>} : memref<16x1xf32, #tpu.memory_space<vmem>>, vector<16x1xf32>,
    %cst_23 = arith.constant 9.99999997E-7 : f32
    %33 = vector.broadcast %cst_23 : f32 to vector<16x128xf32>
    %34 = arith.addf %8, %33 : vector<16x128xf32>
    %cst_24 = arith.constant 1.000000e+00 : f32
    %35 = vector.broadcast %cst_24 : f32 to vector<16x128xf32>
    %36 = arith.divf %35, %34 : vector<16x128xf32>
    %c0_25 = arith.constant 0 : index
    %c0_26 = arith.constant 0 : index
    %37 = vector.load %arg4[%c0_25, %c0_26] : memref<16x128xf32, #tpu.memory_space<vmem>>, vector<16x128xf32>
    %c0_27 = arith.constant 0 : index
    %c0_28 = arith.constant 0 : index
    %38 = vector.load %arg3[%c0_27, %c0_28] : memref<16x128xf32, #tpu.memory_space<vmem>>, vector<16x128xf32>
    %39 = arith.mulf %36, %38 : vector<16x128xf32>
    %40 = arith.addf %37, %39 : vector<16x128xf32>
    %cst_29 = arith.constant -5.000000e-01 : f32
    %41 = vector.broadcast %cst_29 : f32 to vector<16x128xf32>
    %42 = arith.mulf %41, %40 : vector<16x128xf32>
    %43 = arith.mulf %36, %7 : vector<16x128xf32>
    %44 = arith.subf %42, %43 : vector<16x128xf32>
    %45 = tpu.iota {dimensions = array<i32: 1>} : vector<16x128xi32>
    %c0_i32_30 = arith.constant 0 : i32
    %46 = vector.broadcast %c0_i32_30 : i32 to vector<16x128xi32>
    %47 = arith.cmpi eq, %45, %46 : vector<16x128xi32>
    %c1_i32 = arith.constant 1 : i32
    %48 = tpu.dynamic_rotate %34 by %c1_i32 dim 1 : vector<16x128xf32>, i32 -> vector<16x128xf32>
    %49 = arith.select %47, %34, %48 : vector<16x128xi1>, vector<16x128xf32>
    %c127_i32 = arith.constant 127 : i32
    %50 = vector.broadcast %c127_i32 : i32 to vector<16x128xi32>
    %51 = arith.cmpi eq, %45, %50 : vector<16x128xi32>
    %c127_i32_31 = arith.constant 127 : i32
    %52 = tpu.dynamic_rotate %34 by %c127_i32_31 dim 1 : vector<16x128xf32>, i32 -> vector<16x128xf32>
    %53 = arith.select %51, %34, %52 : vector<16x128xi1>, vector<16x128xf32>
    %54 = arith.subf %53, %49 : vector<16x128xf32>
    %cst_32 = arith.constant 5.000000e-01 : f32
    %55 = vector.broadcast %cst_32 : f32 to vector<16x128xf32>
    %56 = arith.mulf %55, %54 : vector<16x128xf32>
    %57 = arith.mulf %56, %34 : vector<16x128xf32>
    %58 = arith.mulf %57, %34 : vector<16x128xf32>
    %59 = arith.mulf %44, %7 : vector<16x128xf32>
    %60 = arith.mulf %59, %58 : vector<16x128xf32>
    %cst_33 = arith.constant dense<0.000000e+00> : vector<16xf32>
    %61 = vector.multi_reduction <add>, %60, %cst_33 [1] : vector<16x128xf32> to vector<16xf32>
    %62 = vector.shape_cast %61 : vector<16xf32> to vector<16x1xf32>
    %63 = arith.mulf %17, %58 : vector<16x128xf32>
    %cst_34 = arith.constant dense<0.000000e+00> : vector<16xf32>
    %64 = vector.multi_reduction <add>, %63, %cst_34 [1] : vector<16x128xf32> to vector<16xf32>
    %65 = vector.shape_cast %64 : vector<16xf32> to vector<16x1xf32>
    %cst_35 = arith.constant 9.99999997E-7 : f32
    %66 = vector.broadcast %cst_35 : f32 to vector<16x1xf32>
    %67 = arith.addf %65, %66 : vector<16x1xf32>
    %68 = arith.divf %62, %67 : vector<16x1xf32>
    %69 = vector.broadcast %68 : vector<16x1xf32> to vector<16x128xf32>
    %70 = arith.mulf %69, %7 : vector<16x128xf32>
    %71 = arith.subf %44, %70 : vector<16x128xf32>
    %c0_36 = arith.constant 0 : index
    %c0_37 = arith.constant 0 : index
    %72 = vector.load %arg8[%c0_36, %c0_37] : memref<16x1xf32, #tpu.memory_space<vmem>>, vector<16x1xf32>
    %73 = arith.mulf %71, %71 : vector<16x128xf32>
    %cst_38 = arith.constant dense<0.000000e+00> : vector<16xf32>
    %74 = vector.multi_reduction <add>, %73, %cst_38 [1] : vector<16x128xf32> to vector<16xf32>
    %75 = vector.shape_cast %74 : vector<16xf32> to vector<16x1xf32>
    %76 = arith.addf %72, %75 : vector<16x1xf32>
    %c0_39 = arith.constant 0 : index
    %c0_40 = arith.constant 0 : index
    %77 = vector.load %arg8[%c0_39, %c0_40] : memref<16x1xf32, #tpu.memory_space<vmem>>, vector<16x1xf32>
    tpu.vector_store %arg8[%c0_39, %c0_40], %76 {strides = array<i32>} : memref<16x1xf32, #tpu.memory_space<vmem>>, vector<16x1xf32>,
    %78 = arith.mulf %17, %57 : vector<16x128xf32>
    %cst_41 = arith.constant dense<0.000000e+00> : vector<16xf32>
    %79 = vector.multi_reduction <add>, %78, %cst_41 [1] : vector<16x128xf32> to vector<16xf32>
    %80 = vector.shape_cast %79 : vector<16xf32> to vector<16x1xf32>
    %cst_42 = arith.constant 1.000000e+00 : f32
    %81 = vector.broadcast %cst_42 : f32 to vector<16x1xf32>
    %82 = arith.subf %80, %81 : vector<16x1xf32>
    %c0_43 = arith.constant 0 : index
    %c0_44 = arith.constant 0 : index
    %83 = vector.load %arg11[%c0_43, %c0_44] : memref<16x1xf32, #tpu.memory_space<vmem>>, vector<16x1xf32>
    %84 = arith.mulf %82, %82 : vector<16x1xf32>
    %85 = arith.addf %83, %84 : vector<16x1xf32>
    %c0_45 = arith.constant 0 : index
    %c0_46 = arith.constant 0 : index
    %86 = vector.load %arg11[%c0_45, %c0_46] : memref<16x1xf32, #tpu.memory_space<vmem>>, vector<16x1xf32>
    tpu.vector_store %arg11[%c0_45, %c0_46], %85 {strides = array<i32>} : memref<16x1xf32, #tpu.memory_space<vmem>>, vector<16x1xf32>,
    %c0_i32_47 = arith.constant 0 : i32
    %87 = arith.cmpi eq, %arg1, %c0_i32_47 : i32
    %88 = arith.extui %87 : i1 to i32
    %c0_i32_48 = arith.constant 0 : i32
    %89 = arith.cmpi ne, %88, %c0_i32_48 : i32
    scf.if %89 {
      %90 = tpu.iota {dimensions = array<i32: 0>} : vector<8x128xi32>
      %cst_49 = arith.constant 0.000000e+00 : f32
      %91 = vector.broadcast %cst_49 : f32 to vector<8x128xf32>
      %c0_50 = arith.constant 0 : index
      %c0_51 = arith.constant 0 : index
      %92 = vector.load %arg8[%c0_50, %c0_51] : memref<16x1xf32, #tpu.memory_space<vmem>>, vector<16x1xf32>
      %cst_52 = arith.constant dense<0.000000e+00> : vector<1xf32>
      %93 = vector.multi_reduction <add>, %92, %cst_52 [0] : vector<16x1xf32> to vector<1xf32>
      %94 = vector.shape_cast %93 : vector<1xf32> to vector<1x1xf32>
      %c0_53 = arith.constant 0 : index
      %c0_54 = arith.constant 0 : index
      %95 = vector.load %arg9[%c0_53, %c0_54] : memref<16x1xf32, #tpu.memory_space<vmem>>, vector<16x1xf32>
      %cst_55 = arith.constant dense<0.000000e+00> : vector<1xf32>
      %96 = vector.multi_reduction <add>, %95, %cst_55 [0] : vector<16x1xf32> to vector<1xf32>
      %97 = vector.shape_cast %96 : vector<1xf32> to vector<1x1xf32>
      %c0_56 = arith.constant 0 : index
      %c0_57 = arith.constant 0 : index
      %98 = vector.load %arg10[%c0_56, %c0_57] : memref<16x1xf32, #tpu.memory_space<vmem>>, vector<16x1xf32>
      %cst_58 = arith.constant dense<0.000000e+00> : vector<1xf32>
      %99 = vector.multi_reduction <add>, %98, %cst_58 [0] : vector<16x1xf32> to vector<1xf32>
      %100 = vector.shape_cast %99 : vector<1xf32> to vector<1x1xf32>
      %c0_59 = arith.constant 0 : index
      %c0_60 = arith.constant 0 : index
      %101 = vector.load %arg11[%c0_59, %c0_60] : memref<16x1xf32, #tpu.memory_space<vmem>>, vector<16x1xf32>
      %cst_61 = arith.constant dense<0.000000e+00> : vector<1xf32>
      %102 = vector.multi_reduction <add>, %101, %cst_61 [0] : vector<16x1xf32> to vector<1xf32>
      %103 = vector.shape_cast %102 : vector<1xf32> to vector<1x1xf32>
      %c0_62 = arith.constant 0 : index
      %c0_63 = arith.constant 0 : index
      %104 = vector.load %arg12[%c0_62, %c0_63] : memref<16x1xf32, #tpu.memory_space<vmem>>, vector<16x1xf32>
      %cst_64 = arith.constant dense<0.000000e+00> : vector<1xf32>
      %105 = vector.multi_reduction <add>, %104, %cst_64 [0] : vector<16x1xf32> to vector<1xf32>
      %106 = vector.shape_cast %105 : vector<1xf32> to vector<1x1xf32>
      %c0_i32_65 = arith.constant 0 : i32
      %107 = vector.broadcast %c0_i32_65 : i32 to vector<8x128xi32>
      %108 = arith.cmpi eq, %90, %107 : vector<8x128xi32>
      %109 = vector.shape_cast %94 : vector<1x1xf32> to vector<1x1xf32>
      %110 = vector.broadcast %109 : vector<1x1xf32> to vector<8x128xf32>
      %111 = arith.select %108, %110, %91 : vector<8x128xi1>, vector<8x128xf32>
      %c1_i32_66 = arith.constant 1 : i32
      %112 = vector.broadcast %c1_i32_66 : i32 to vector<8x128xi32>
      %113 = arith.cmpi eq, %90, %112 : vector<8x128xi32>
      %114 = vector.shape_cast %97 : vector<1x1xf32> to vector<1x1xf32>
      %115 = vector.broadcast %114 : vector<1x1xf32> to vector<8x128xf32>
      %116 = arith.select %113, %115, %111 : vector<8x128xi1>, vector<8x128xf32>
      %c2_i32 = arith.constant 2 : i32
      %117 = vector.broadcast %c2_i32 : i32 to vector<8x128xi32>
      %118 = arith.cmpi eq, %90, %117 : vector<8x128xi32>
      %119 = vector.shape_cast %100 : vector<1x1xf32> to vector<1x1xf32>
      %120 = vector.broadcast %119 : vector<1x1xf32> to vector<8x128xf32>
      %121 = arith.select %118, %120, %116 : vector<8x128xi1>, vector<8x128xf32>
      %c3_i32 = arith.constant 3 : i32
      %122 = vector.broadcast %c3_i32 : i32 to vector<8x128xi32>
      %123 = arith.cmpi eq, %90, %122 : vector<8x128xi32>
      %124 = vector.shape_cast %103 : vector<1x1xf32> to vector<1x1xf32>
      %125 = vector.broadcast %124 : vector<1x1xf32> to vector<8x128xf32>
      %126 = arith.select %123, %125, %121 : vector<8x128xi1>, vector<8x128xf32>
      %c4_i32 = arith.constant 4 : i32
      %127 = vector.broadcast %c4_i32 : i32 to vector<8x128xi32>
      %128 = arith.cmpi eq, %90, %127 : vector<8x128xi32>
      %129 = vector.shape_cast %106 : vector<1x1xf32> to vector<1x1xf32>
      %130 = vector.broadcast %129 : vector<1x1xf32> to vector<8x128xf32>
      %131 = arith.select %128, %130, %126 : vector<8x128xi1>, vector<8x128xf32>
      %c0_67 = arith.constant 0 : index
      %c0_68 = arith.constant 0 : index
      %132 = vector.load %arg7[%c0_67, %c0_68] : memref<8x128xf32, #tpu.memory_space<vmem>>, vector<8x128xf32>
      tpu.vector_store %arg7[%c0_67, %c0_68], %131 {strides = array<i32>} : memref<8x128xf32, #tpu.memory_space<vmem>>, vector<8x128xf32>,
    } else {
    }
    return
  }
  func.func @transform_0(%arg0: i32, %arg1: i32) -> (i32, i32) {
    %c1_i32 = arith.constant 1 : i32
    %0 = arith.muli %arg0, %c1_i32 : i32
    %1 = arith.addi %0, %arg1 : i32
    %c0_i32 = arith.constant 0 : i32
    %c0_i32_0 = arith.constant 0 : i32
    return %1, %c0_i32 : i32, i32
  }
  func.func @transform_1(%arg0: i32, %arg1: i32) -> (i32, i32) {
    %c1_i32 = arith.constant 1 : i32
    %0 = arith.muli %arg0, %c1_i32 : i32
    %1 = arith.addi %0, %arg1 : i32
    %c0_i32 = arith.constant 0 : i32
    %c0_i32_0 = arith.constant 0 : i32
    return %1, %c0_i32 : i32, i32
  }
  func.func @transform_2(%arg0: i32, %arg1: i32) -> (i32, i32) {
    %c1_i32 = arith.constant 1 : i32
    %0 = arith.muli %arg0, %c1_i32 : i32
    %1 = arith.addi %0, %arg1 : i32
    %c0_i32 = arith.constant 0 : i32
    %c0_i32_0 = arith.constant 0 : i32
    return %1, %c0_i32 : i32, i32
  }
  func.func @transform_3(%arg0: i32, %arg1: i32) -> (i32, i32) {
    %c1_i32 = arith.constant 1 : i32
    %0 = arith.muli %arg0, %c1_i32 : i32
    %1 = arith.addi %0, %arg1 : i32
    %c0_i32 = arith.constant 0 : i32
    %c0_i32_0 = arith.constant 0 : i32
    return %1, %c0_i32 : i32, i32
  }
  func.func @transform_4(%arg0: i32, %arg1: i32) -> (i32, i32) {
    %c1_i32 = arith.constant 1 : i32
    %0 = arith.muli %arg0, %c1_i32 : i32
    %1 = arith.addi %0, %arg1 : i32
    %c0_i32 = arith.constant 0 : i32
    %c0_i32_0 = arith.constant 0 : i32
    return %1, %c0_i32 : i32, i32
  }
  func.func @transform_5(%arg0: i32, %arg1: i32) -> (i32, i32) {
    %c0_i32 = arith.constant 0 : i32
    %c0_i32_0 = arith.constant 0 : i32
    return %arg0, %c0_i32 : i32, i32
  }
}

</mosaic_0001>

<llo_original>
// kernel: tpu_custom_call.1
$region0: #{tpu_custom_call.1}
  #allocation0 [shape = 'u32[]', space=smem, size = 0x4, offset = 0x4, fixed_abs, tag = 'smem constant byte address 0x4 - core index']
  #allocation1 [shape = 'u32[144,128]{1,0:T(1,128)}', space=vmem, size = 0x12000, scoped, tag = 'internal scratch']
  #allocation2 [shape = 'f32[16,1]{1,0:T(8,128)}', space=vmem, size = 0x2000, scoped, tag = 'scratch operand']
  #allocation3 [shape = 'f32[16,1]{1,0:T(8,128)}', space=vmem, size = 0x2000, scoped, tag = 'scratch operand']
  #allocation4 [shape = 'f32[16,1]{1,0:T(8,128)}', space=vmem, size = 0x2000, scoped, tag = 'scratch operand']
  #allocation5 [shape = 'f32[16,1]{1,0:T(8,128)}', space=vmem, size = 0x2000, scoped, tag = 'scratch operand']
  #allocation6 [shape = 'f32[16,1]{1,0:T(8,128)}', space=vmem, size = 0x2000, scoped, tag = 'scratch operand']
  %s0 = inlined_call_operand.hbm [shape: f32[16,128], index: 0, kind: input, shape index: {}]
  %s1 = inlined_call_operand.hbm [shape: f32[16,128], index: 1, kind: input, shape index: {}]
  %s2 = inlined_call_operand.hbm [shape: f32[16,128], index: 2, kind: input, shape index: {}]
  %s3 = inlined_call_operand.hbm [shape: f32[16,128], index: 3, kind: input, shape index: {}]
  %s4 = inlined_call_operand.hbm [shape: f32[16,128], index: 4, kind: input, shape index: {}]
  %s5 = inlined_call_operand.hbm [shape: f32[8,128], index: 5, kind: output, shape index: {}]
  %s6 = sld [smem:[#allocation0]]
  $region58: #{tpu_custom_call.1} parent=0
    _
  %s8 = ssub.s32 1, %s6
  %s9 = scalar_select 0, %s8, %s6
  $region1: #{tpu_custom_call.1} parent=0
    #allocation7 [shape = 'u8[8192]{0}', space=vmem, size = 0x2000, scoped, tag = 'input window, operand 0, single buffered']
    #allocation8 [shape = 's32[1]{0}', space=sflag, size = 0x4, scoped, tag = 'scoped memory for tpu_custom_call.1']
    #allocation9 [shape = 's32[1]{0}', space=sflag, size = 0x4, scoped, tag = 'scoped memory for tpu_custom_call.1']
    #allocation10 [shape = 'u8[8192]{0}', space=vmem, size = 0x2000, scoped, tag = 'input window, operand 1, single buffered']
    #allocation11 [shape = 's32[1]{0}', space=sflag, size = 0x4, scoped, tag = 'scoped memory for tpu_custom_call.1']
    #allocation12 [shape = 'u8[8192]{0}', space=vmem, size = 0x2000, scoped, tag = 'input window, operand 2, single buffered']
    #allocation13 [shape = 'u8[8192]{0}', space=vmem, size = 0x2000, scoped, tag = 'input window, operand 3, single buffered']
    #allocation14 [shape = 's32[1]{0}', space=sflag, size = 0x4, scoped, tag = 'scoped memory for tpu_custom_call.1']
    #allocation15 [shape = 'u8[8192]{0}', space=vmem, size = 0x2000, scoped, tag = 'input window, operand 4, single buffered']
    #allocation16 [shape = 'u8[4096]{0}', space=vmem, size = 0x1000, scoped, tag = 'output window, operand 0, single buffered']
    %10 = vsyncpa [#allocation8], 0
    %11 = vsyncpa [#allocation11], 0
    %12 = vsyncpa [#allocation14], 0
    %13 = vsyncpa [#allocation9], 0
    // Predicated region
    $region2: #{tpu_custom_call.1} parent=1 // pred_check
      _
    $region3: #{tpu_custom_call.1} parent=1 // pred_check_branch
      %15 = sbr.rel (0) target = $region5
    $region4: #{tpu_custom_call.1} parent=1 // pred_region
      %s16 = sadd.s32 0, 0
      %s17 = smul.u32 2, %s16
      %s19 = ssub.s32 256, 256
      %20 = vsyncadd [#allocation8], %s19
      %s21 = smul.addr %s17, 128
      %s22 = scalar_lea.hbm %s0, %s21
      %s23 = sshll.u32 [#allocation7], 4
      %s24 = int_to_ptr.vmem [resolvable:$true] %s23
      %29 = dma.hbm_to_vmem [thread:$0]  %s22, 256, %s24, [#allocation8], 128, 128, 8
    $region5: #{tpu_custom_call.1} parent=1 // pred_fallthru
      _
    // Predicated region
    $region6: #{tpu_custom_call.1} parent=1 // pred_check
      _
    $region7: #{tpu_custom_call.1} parent=1 // pred_check_branch
      %31 = sbr.rel (0) target = $region9
    $region8: #{tpu_custom_call.1} parent=1 // pred_region
      %s32 = sadd.s32 0, 0
      %s33 = smul.u32 2, %s32
      %s35 = ssub.s32 256, 256
      %36 = vsyncadd [#allocation11], %s35
      %s37 = smul.addr %s33, 128
      %s38 = scalar_lea.hbm %s1, %s37
      %s39 = sshll.u32 [#allocation10], 4
      %s40 = int_to_ptr.vmem [resolvable:$true] %s39
      %45 = dma.hbm_to_vmem [thread:$0]  %s38, 256, %s40, [#allocation11], 128, 128, 8
    $region9: #{tpu_custom_call.1} parent=1 // pred_fallthru
      _
    // Predicated region
    $region10: #{tpu_custom_call.1} parent=1 // pred_check
      _
    $region11: #{tpu_custom_call.1} parent=1 // pred_check_branch
      %47 = sbr.rel (0) target = $region13
    $region12: #{tpu_custom_call.1} parent=1 // pred_region
      %s48 = sadd.s32 0, 0
      %s49 = smul.u32 2, %s48
      %s51 = ssub.s32 256, 256
      %52 = vsyncadd [#allocation11], %s51
      %s53 = smul.addr %s49, 128
      %s54 = scalar_lea.hbm %s2, %s53
      %s55 = sshll.u32 [#allocation12], 4
      %s56 = int_to_ptr.vmem [resolvable:$true] %s55
      %61 = dma.hbm_to_vmem [thread:$0]  %s54, 256, %s56, [#allocation11], 128, 128, 8
    $region13: #{tpu_custom_call.1} parent=1 // pred_fallthru
      _
    // Predicated region
    $region14: #{tpu_custom_call.1} parent=1 // pred_check
      _
    $region15: #{tpu_custom_call.1} parent=1 // pred_check_branch
      %63 = sbr.rel (0) target = $region17
    $region16: #{tpu_custom_call.1} parent=1 // pred_region
      %s64 = sadd.s32 0, 0
      %s65 = smul.u32 2, %s64
      %s67 = ssub.s32 256, 256
      %68 = vsyncadd [#allocation14], %s67
      %s69 = smul.addr %s65, 128
      %s70 = scalar_lea.hbm %s3, %s69
      %s71 = sshll.u32 [#allocation13], 4
      %s72 = int_to_ptr.vmem [resolvable:$true] %s71
      %77 = dma.hbm_to_vmem [thread:$0]  %s70, 256, %s72, [#allocation14], 128, 128, 8
    $region17: #{tpu_custom_call.1} parent=1 // pred_fallthru
      _
    // Predicated region
    $region18: #{tpu_custom_call.1} parent=1 // pred_check
      _
    $region19: #{tpu_custom_call.1} parent=1 // pred_check_branch
      %79 = sbr.rel (0) target = $region21
    $region20: #{tpu_custom_call.1} parent=1 // pred_region
      %s80 = sadd.s32 0, 0
      %s81 = smul.u32 2, %s80
      %s83 = ssub.s32 256, 256
      %84 = vsyncadd [#allocation14], %s83
      %s85 = smul.addr %s81, 128
      %s86 = scalar_lea.hbm %s4, %s85
      %s87 = sshll.u32 [#allocation15], 4
      %s88 = int_to_ptr.vmem [resolvable:$true] %s87
      %93 = dma.hbm_to_vmem [thread:$0]  %s86, 256, %s88, [#allocation14], 128, 128, 8
    $region21: #{tpu_custom_call.1} parent=1 // pred_fallthru
      _
    // Predicated region
    $region22: #{tpu_custom_call.1} parent=1 // pred_check
      _
    $region23: #{tpu_custom_call.1} parent=1 // pred_check_branch
      %95 = sbr.rel (0) target = $region25
    $region24: #{tpu_custom_call.1} parent=1 // pred_region
      %96 = dma.done [#allocation8], 256
    $region25: #{tpu_custom_call.1} parent=1 // pred_fallthru
      _
    // Predicated region
    $region26: #{tpu_custom_call.1} parent=1 // pred_check
      _
    $region27: #{tpu_custom_call.1} parent=1 // pred_check_branch
      %98 = sbr.rel (0) target = $region29
    $region28: #{tpu_custom_call.1} parent=1 // pred_region
      %99 = dma.done [#allocation11], 256
    $region29: #{tpu_custom_call.1} parent=1 // pred_fallthru
      _
    // Predicated region
    $region30: #{tpu_custom_call.1} parent=1 // pred_check
      _
    $region31: #{tpu_custom_call.1} parent=1 // pred_check_branch
      %101 = sbr.rel (0) target = $region33
    $region32: #{tpu_custom_call.1} parent=1 // pred_region
      %102 = dma.done [#allocation11], 256
    $region33: #{tpu_custom_call.1} parent=1 // pred_fallthru
      _
    // Predicated region
    $region34: #{tpu_custom_call.1} parent=1 // pred_check
      _
    $region35: #{tpu_custom_call.1} parent=1 // pred_check_branch
      %104 = sbr.rel (0) target = $region37
    $region36: #{tpu_custom_call.1} parent=1 // pred_region
      %105 = dma.done [#allocation14], 256
    $region37: #{tpu_custom_call.1} parent=1 // pred_fallthru
      _
    // Predicated region
    $region38: #{tpu_custom_call.1} parent=1 // pred_check
      _
    $region39: #{tpu_custom_call.1} parent=1 // pred_check_branch
      %107 = sbr.rel (0) target = $region41
    $region40: #{tpu_custom_call.1} parent=1 // pred_region
      %108 = dma.done [#allocation14], 256
    $region41: #{tpu_custom_call.1} parent=1 // pred_fallthru
      _
    %s109 = sadd.s32 0, 0
    %s110 = smul.u32 2, %s109
    %s111 = sadd.s32 0, 0
    %s112 = smul.u32 2, %s111
    %s113 = sadd.s32 0, 0
    %s114 = smul.u32 2, %s113
    %s115 = sadd.s32 0, 0
    %s116 = smul.u32 2, %s115
    %s117 = sadd.s32 0, 0
    %s118 = smul.u32 2, %s117
    %p119 = scmp.eq.s32.totalorder 0, 0
    // Predicated region
    $region42: #{tpu_custom_call.1} parent=1 // pred_check
      %p120 = pneg %p119
    $region43: #{tpu_custom_call.1} parent=1 // pred_check_branch
      %122 = sbr.rel (%p120) target = $region45
    $region44: #{tpu_custom_call.1} parent=1 // pred_region
      %vm123 = vcmask 7168
      %124 = vst.msk [vmem:[#allocation2] sm:$0xff] %vm123, 0.0
      %125 = vst.msk [vmem:[#allocation2 + $0x8] sm:$0xff] %vm123, 0.0
      %126 = vst.msk [vmem:[#allocation3] sm:$0xff] %vm123, 0.0
      %127 = vst.msk [vmem:[#allocation3 + $0x8] sm:$0xff] %vm123, 0.0
      %128 = vst.msk [vmem:[#allocation4] sm:$0xff] %vm123, 0.0
      %129 = vst.msk [vmem:[#allocation4 + $0x8] sm:$0xff] %vm123, 0.0
      %130 = vst.msk [vmem:[#allocation5] sm:$0xff] %vm123, 0.0
      %131 = vst.msk [vmem:[#allocation5 + $0x8] sm:$0xff] %vm123, 0.0
      %132 = vst.msk [vmem:[#allocation6] sm:$0xff] %vm123, 0.0
      %133 = vst.msk [vmem:[#allocation6 + $0x8] sm:$0xff] %vm123, 0.0
    $region45: #{tpu_custom_call.1} parent=1 // pred_fallthru
      _
    %v134 = vld [vmem:[#allocation7] sm:$0xff]
    %v135 = vld [vmem:[#allocation7 + $0x8] sm:$0xff]
    %v136 = vmax.f32 %v134, -10.0
    %v137 = vmax.f32 %v135, -10.0
    %v138 = vmin.f32 %v136, 10.0
    %v139 = vmin.f32 %v137, 10.0
    %v140 = vld [vmem:[#allocation13] sm:$0xff]
    %v141 = vld [vmem:[#allocation13 + $0x8] sm:$0xff]
    %v142 = vld [vmem:[#allocation15] sm:$0xff]
    %v143 = vld [vmem:[#allocation15 + $0x8] sm:$0xff]
    %v144 = vsub.f32 %v138, %v142
    %v145 = vsub.f32 %v139, %v143
    %v146 = vld [vmem:[#allocation6] sm:$0xff]
    %v147 = vld [vmem:[#allocation6 + $0x8] sm:$0xff]
    %v148 = vmul.f32 %v144, %v144
    %v149 = vmul.f32 %v145, %v145
    %150 = vadd.xlane.f32.xlu0 %v148
    %v151 = vpop.xlane.xlu0 %150
    %152 = vadd.xlane.f32.xlu0 %v149
    %v153 = vpop.xlane.xlu0 %152
    %v154 = vadd.f32 %v146, %v151
    %v155 = vadd.f32 %v147, %v153
    %vm156 = vcmask 7168
    %157 = vst.msk [vmem:[#allocation6] sm:$0xff] %vm156, %v154
    %158 = vst.msk [vmem:[#allocation6 + $0x8] sm:$0xff] %vm156, %v155
    %v159 = vmul.f32 %v138, %v138
    %v160 = vmul.f32 %v139, %v139
    %vm161 = vcmp.ge.f32.partialorder %v140, 20.0
    %vm162 = vcmp.ge.f32.partialorder %v141, 20.0
    %v163 = vsel %vm161, 1, 0
    %v164 = vsel %vm162, 1, 0
    %v165 = vcvt.s32.f32 %v163
    %v166 = vcvt.s32.f32 %v164
    %v167 = vld [vmem:[#allocation3] sm:$0xff]
    %v168 = vld [vmem:[#allocation3 + $0x8] sm:$0xff]
    %169 = vadd.xlane.f32.xlu0 %v165
    %v170 = vpop.xlane.xlu0 %169
    %171 = vadd.xlane.f32.xlu0 %v166
    %v172 = vpop.xlane.xlu0 %171
    %v173 = vadd.f32 %v167, %v170
    %v174 = vadd.f32 %v168, %v172
    %175 = vst.msk [vmem:[#allocation3] sm:$0xff] %vm156, %v173
    %176 = vst.msk [vmem:[#allocation3 + $0x8] sm:$0xff] %vm156, %v174
    %v177 = vld [vmem:[#allocation4] sm:$0xff]
    %v178 = vld [vmem:[#allocation4 + $0x8] sm:$0xff]
    %v179 = vmul.f32 %v165, %v159
    %v180 = vmul.f32 %v166, %v160
    %181 = vadd.xlane.f32.xlu0 %v179
    %v182 = vpop.xlane.xlu0 %181
    %183 = vadd.xlane.f32.xlu0 %v180
    %v184 = vpop.xlane.xlu0 %183
    %v185 = vadd.f32 %v177, %v182
    %v186 = vadd.f32 %v178, %v184
    %187 = vst.msk [vmem:[#allocation4] sm:$0xff] %vm156, %v185
    %188 = vst.msk [vmem:[#allocation4 + $0x8] sm:$0xff] %vm156, %v186
    %v189 = vadd.f32 %v140, 1e-06
    %v190 = vadd.f32 %v141, 1e-06
    %v191 = vrcp.pop %v189
    %v192 = vmul.f32 1.0, %v191
    %v193 = vrcp.pop %v190
    %v194 = vmul.f32 1.0, %v193
    %v195 = vld [vmem:[#allocation12] sm:$0xff]
    %v196 = vld [vmem:[#allocation12 + $0x8] sm:$0xff]
    %v197 = vld [vmem:[#allocation10] sm:$0xff]
    %v198 = vld [vmem:[#allocation10 + $0x8] sm:$0xff]
    %v199 = vmul.f32 %v192, %v197
    %v200 = vmul.f32 %v194, %v198
    %v201 = vadd.f32 %v195, %v199
    %v202 = vadd.f32 %v196, %v200
    %v203 = vmul.f32 %v201, -0.5
    %v204 = vmul.f32 %v202, -0.5
    %v205 = vmul.f32 %v192, %v138
    %v206 = vmul.f32 %v194, %v139
    %v207 = vsub.f32 %v203, %v205
    %v208 = vsub.f32 %v204, %v206
    %v209 = vlaneseq
    %v210 = vand.u32 %v209, 127
    %vm211 = vcmp.eq.s32.totalorder %v210, 0
    %212 = vrot.lane.b32.xlu0 %v189, 1
    %v213 = vpop.permute.xlu0 %212
    %214 = vrot.lane.b32.xlu0 %v190, 1
    %v215 = vpop.permute.xlu0 %214
    %v216 = vsel %vm211, %v189, %v213
    %v217 = vsel %vm211, %v190, %v215
    %vm218 = vcmp.eq.s32.totalorder %v210, 127
    %219 = vrot.lane.b32.xlu0 %v189, 127
    %v220 = vpop.permute.xlu0 %219
    %221 = vrot.lane.b32.xlu0 %v190, 127
    %v222 = vpop.permute.xlu0 %221
    %v223 = vsel %vm218, %v189, %v220
    %v224 = vsel %vm218, %v190, %v222
    %v225 = vsub.f32 %v223, %v216
    %v226 = vsub.f32 %v224, %v217
    %v227 = vmul.f32 %v225, 0.5
    %v228 = vmul.f32 %v226, 0.5
    %v229 = vmul.f32 %v227, %v189
    %v230 = vmul.f32 %v228, %v190
    %v231 = vmul.f32 %v229, %v189
    %v232 = vmul.f32 %v230, %v190
    %v233 = vmul.f32 %v207, %v138
    %v234 = vmul.f32 %v208, %v139
    %v235 = vmul.f32 %v233, %v231
    %v236 = vmul.f32 %v234, %v232
    %237 = vadd.xlane.f32.xlu0 %v235
    %v238 = vpop.xlane.xlu0 %237
    %239 = vadd.xlane.f32.xlu0 %v236
    %v240 = vpop.xlane.xlu0 %239
    %v241 = vmul.f32 %v159, %v231
    %v242 = vmul.f32 %v160, %v232
    %243 = vadd.xlane.f32.xlu0 %v241
    %v244 = vpop.xlane.xlu0 %243
    %245 = vadd.xlane.f32.xlu0 %v242
    %v246 = vpop.xlane.xlu0 %245
    %v247 = vadd.f32 %v244, 1e-06
    %v248 = vadd.f32 %v246, 1e-06
    %v249 = vrcp.pop %v247
    %v250 = vmul.f32 %v238, %v249
    %v251 = vrcp.pop %v248
    %v252 = vmul.f32 %v240, %v251
    %v253 = vmul.f32 %v250, %v138
    %v254 = vmul.f32 %v252, %v139
    %v255 = vsub.f32 %v207, %v253
    %v256 = vsub.f32 %v208, %v254
    %v257 = vld [vmem:[#allocation2] sm:$0xff]
    %v258 = vld [vmem:[#allocation2 + $0x8] sm:$0xff]
    %v259 = vmul.f32 %v255, %v255
    %v260 = vmul.f32 %v256, %v256
    %261 = vadd.xlane.f32.xlu0 %v259
    %v262 = vpop.xlane.xlu0 %261
    %263 = vadd.xlane.f32.xlu0 %v260
    %v264 = vpop.xlane.xlu0 %263
    %v265 = vadd.f32 %v257, %v262
    %v266 = vadd.f32 %v258, %v264
    %267 = vst.msk [vmem:[#allocation2] sm:$0xff] %vm156, %v265
    %268 = vst.msk [vmem:[#allocation2 + $0x8] sm:$0xff] %vm156, %v266
    %v269 = vmul.f32 %v159, %v229
    %v270 = vmul.f32 %v160, %v230
    %271 = vadd.xlane.f32.xlu0 %v269
    %v272 = vpop.xlane.xlu0 %271
    %273 = vadd.xlane.f32.xlu0 %v270
    %v274 = vpop.xlane.xlu0 %273
    %v275 = vsub.f32 %v272, 1.0
    %v276 = vsub.f32 %v274, 1.0
    %v277 = vld [vmem:[#allocation5] sm:$0xff]
    %v278 = vld [vmem:[#allocation5 + $0x8] sm:$0xff]
    %v279 = vmul.f32 %v275, %v275
    %v280 = vmul.f32 %v276, %v276
    %v281 = vadd.f32 %v277, %v279
    %v282 = vadd.f32 %v278, %v280
    %283 = vst.msk [vmem:[#allocation5] sm:$0xff] %vm156, %v281
    %284 = vst.msk [vmem:[#allocation5 + $0x8] sm:$0xff] %vm156, %v282
    // Predicated region
    $region46: #{tpu_custom_call.1} parent=1 // pred_check
      %p285 = pneg %p119
    $region47: #{tpu_custom_call.1} parent=1 // pred_check_branch
      %287 = sbr.rel (%p285) target = $region49
    $region48: #{tpu_custom_call.1} parent=1 // pred_region
      %v288 = vlaneseq
      %v289 = vshrl.u32 %v288, 7
      %v290 = vld [vmem:[#allocation2] sm:$0xff]
      %v291 = vld [vmem:[#allocation2 + $0x8] sm:$0xff]
      %v292 = vsel %vm156, %v290, 0.0
      %v293 = vsel %vm156, %v291, 0.0
      %v294 = vadd.f32 %v292, %v293
      %v295 = vrot.slane %v294, 4
      %v296 = vadd.f32 %v294, %v295
      %v297 = vrot.slane %v296, 2
      %v298 = vadd.f32 %v296, %v297
      %v299 = vrot.slane %v298, 1
      %v300 = vadd.f32 %v298, %v299
      %v301 = vld [vmem:[#allocation3] sm:$0xff]
      %v302 = vld [vmem:[#allocation3 + $0x8] sm:$0xff]
      %v303 = vsel %vm156, %v301, 0.0
      %v304 = vsel %vm156, %v302, 0.0
      %v305 = vadd.f32 %v303, %v304
      %v306 = vrot.slane %v305, 4
      %v307 = vadd.f32 %v305, %v306
      %v308 = vrot.slane %v307, 2
      %v309 = vadd.f32 %v307, %v308
      %v310 = vrot.slane %v309, 1
      %v311 = vadd.f32 %v309, %v310
      %v312 = vld [vmem:[#allocation4] sm:$0xff]
      %v313 = vld [vmem:[#allocation4 + $0x8] sm:$0xff]
      %v314 = vsel %vm156, %v312, 0.0
      %v315 = vsel %vm156, %v313, 0.0
      %v316 = vadd.f32 %v314, %v315
      %v317 = vrot.slane %v316, 4
      %v318 = vadd.f32 %v316, %v317
      %v319 = vrot.slane %v318, 2
      %v320 = vadd.f32 %v318, %v319
      %v321 = vrot.slane %v320, 1
      %v322 = vadd.f32 %v320, %v321
      %v323 = vld [vmem:[#allocation5] sm:$0xff]
      %v324 = vld [vmem:[#allocation5 + $0x8] sm:$0xff]
      %v325 = vsel %vm156, %v323, 0.0
      %v326 = vsel %vm156, %v324, 0.0
      %v327 = vadd.f32 %v325, %v326
      %v328 = vrot.slane %v327, 4
      %v329 = vadd.f32 %v327, %v328
      %v330 = vrot.slane %v329, 2
      %v331 = vadd.f32 %v329, %v330
      %v332 = vrot.slane %v331, 1
      %v333 = vadd.f32 %v331, %v332
      %v334 = vld [vmem:[#allocation6] sm:$0xff]
      %v335 = vld [vmem:[#allocation6 + $0x8] sm:$0xff]
      %v336 = vsel %vm156, %v334, 0.0
      %v337 = vsel %vm156, %v335, 0.0
      %v338 = vadd.f32 %v336, %v337
      %v339 = vrot.slane %v338, 4
      %v340 = vadd.f32 %v338, %v339
      %v341 = vrot.slane %v340, 2
      %v342 = vadd.f32 %v340, %v341
      %v343 = vrot.slane %v342, 1
      %v344 = vadd.f32 %v342, %v343
      %vm345 = vcmp.eq.s32.totalorder %v289, 0
      %347 = vset.pattern.permute.xlu0 0
      %348 = vperm.xlu0 %347, %v300
      %v349 = vpop.permute.xlu0 %348
      %v351 = vsel %vm345, %v349, 0.0
      %vm352 = vcmp.eq.s32.totalorder %v289, 1
      %354 = vset.pattern.permute.xlu0 0
      %355 = vperm.xlu0 %354, %v311
      %v356 = vpop.permute.xlu0 %355
      %v358 = vsel %vm352, %v356, %v351
      %vm359 = vcmp.eq.s32.totalorder %v289, 2
      %361 = vset.pattern.permute.xlu0 0
      %362 = vperm.xlu0 %361, %v322
      %v363 = vpop.permute.xlu0 %362
      %v365 = vsel %vm359, %v363, %v358
      %vm366 = vcmp.eq.s32.totalorder %v289, 3
      %368 = vset.pattern.permute.xlu0 0
      %369 = vperm.xlu0 %368, %v333
      %v370 = vpop.permute.xlu0 %369
      %v372 = vsel %vm366, %v370, %v365
      %vm373 = vcmp.eq.s32.totalorder %v289, 4
      %375 = vset.pattern.permute.xlu0 0
      %376 = vperm.xlu0 %375, %v344
      %v377 = vpop.permute.xlu0 %376
      %v379 = vsel %vm373, %v377, %v372
      %380 = vst [vmem:[#allocation16] sm:$0xff] %v379
    $region49: #{tpu_custom_call.1} parent=1 // pred_fallthru
      _
    // Predicated region
    $region50: #{tpu_custom_call.1} parent=1 // pred_check
      _
    $region51: #{tpu_custom_call.1} parent=1 // pred_check_branch
      %382 = sbr.rel (0) target = $region53
    $region52: #{tpu_custom_call.1} parent=1 // pred_region
      %s384 = ssub.s32 128, 128
      %385 = vsyncadd [#allocation9], %s384
      %s387 = sshll.u32 [#allocation16], 4
      %s388 = int_to_ptr.vmem [resolvable:$true] %s387
      %390 = dma.vmem_to_hbm [thread:$0]  %s388, 128, %s5, [#allocation9]
    $region53: #{tpu_custom_call.1} parent=1 // pred_fallthru
      _
    // Predicated region
    $region54: #{tpu_custom_call.1} parent=1 // pred_check
      _
    $region55: #{tpu_custom_call.1} parent=1 // pred_check_branch
      %392 = sbr.rel (0) target = $region57
    $region56: #{tpu_custom_call.1} parent=1 // pred_region
      %393 = dma.done [#allocation9], 128
    $region57: #{tpu_custom_call.1} parent=1 // pred_fallthru
      _
    %394 = vsyncpa [#allocation8], 1
    %395 = vsyncpa [#allocation11], 1
    %396 = vsyncpa [#allocation14], 1
    %397 = vsyncpa [#allocation9], 1

</llo_original>
